<compile_context>
chip_gen: v5e
topology: v5e:2x2
jax: 0.10.0
libtpu: 0.0.40
codegen_flags: <defaults>
</compile_context>

<pallas_src>
import functools

import jax
import jax.numpy as jnp
from jax.experimental import pallas as pl
from jax.experimental.pallas import tpu as pltpu

LANES = 128          # vreg lane width
SUBLANES = 8         # vreg sublane count
NUM_CORES = 2        # leading "parallel" axis; sharded across TCs on v7x
TARGET_BLOCK_BYTES = 4 << 20   # ~4 MiB per input per block


def _charbonnier_kernel(x_ref, y_ref, o_ref, acc_ref, *, eps, block_rows,
                        blocks_per_core, n_blocks, n_valid_rows_last,
                        needs_mask):
    c = pl.program_id(0)             # core-split axis ("parallel")
    i = pl.program_id(1)             # per-core reduction axis ("arbitrary")
    g = c * blocks_per_core + i      # global block index
    last_i = pl.num_programs(1) - 1

    @pl.when(i == 0)
    def _():
        acc_ref[...] = jnp.zeros_like(acc_ref)

    x = x_ref[...].astype(jnp.float32)
    y = y_ref[...].astype(jnp.float32)
    diff = x - y
    val = jnp.sqrt(diff * diff + jnp.float32(eps))

    def accumulate(v):
        # (block_rows,128) -> (block_rows//8, 8, 128) stays within (8,128)
        # tiles (layout-free); axis-0 sum is plain vreg-wise VALU adds into a
        # single-vreg accumulator.
        acc_ref[...] += jnp.sum(v.reshape(-1, SUBLANES, LANES), axis=0)

    if needs_mask:
        # Only the globally-last block overhangs the valid row count; mask
        # the stale trailing rows there (block-local static bound).
        @pl.when(g == n_blocks - 1)
        def _():
            row_ids = jax.lax.broadcasted_iota(
                jnp.int32, (block_rows, LANES), 0)
            accumulate(jnp.where(row_ids < n_valid_rows_last, val,
                                 jnp.float32(0.0)))

        @pl.when(g < n_blocks - 1)
        def _():
            accumulate(val)
    else:
        # Skip duplicated (index-clamped) blocks past the end of the grid.
        @pl.when(g < n_blocks)
        def _():
            accumulate(val)

    @pl.when(i == last_i)
    def _():
        o_ref[0] = acc_ref[...]


def charbonnier_loss(source, target, eps: float = 1e-12,
                     target_block_bytes: int = TARGET_BLOCK_BYTES):
    """Charbonnier loss: mean(sqrt((source - target)^2 + eps))."""
    assert source.shape == target.shape
    n = int(source.size)
    if n == 0:
        return jnp.float32(0.0)

    xf = source.reshape(-1)
    yf = target.reshape(-1)

    n_aligned = (n // LANES) * LANES
    total = jnp.float32(0.0)

    if n_aligned:
        rows = n_aligned // LANES
        if n_aligned == n:
            x2 = xf.reshape(rows, LANES)
            y2 = yf.reshape(rows, LANES)
        else:
            x2 = xf[:n_aligned].reshape(rows, LANES)
            y2 = yf[:n_aligned].reshape(rows, LANES)

        itemsize = int(jnp.dtype(source.dtype).itemsize)

        # ~4 MiB per input per block: 8192 rows f32, 16384 rows bf16.
        block_rows = max(SUBLANES,
                         (target_block_bytes // (LANES * itemsize))
                         // SUBLANES * SUBLANES)
        rows_up8 = ((rows + SUBLANES - 1) // SUBLANES) * SUBLANES
        block_rows = int(min(block_rows, rows_up8))

        n_blocks = int(pl.cdiv(rows, block_rows))
        blocks_per_core = int(pl.cdiv(n_blocks, NUM_CORES))
        n_valid_rows_last = rows - (n_blocks - 1) * block_rows
        needs_mask = (n_valid_rows_last != block_rows)

        block_bytes = block_rows * LANES * itemsize
        # 2 inputs x 2 pipeline buffers x block_bytes + headroom; explicit so
        # 4 MiB blocks fit v5e's 16 MiB scoped default and stay well under
        # v7x's 64 MiB physical VMEM.
        vmem_limit = int(min(48 << 20, 4 * block_bytes + (16 << 20)))

        def in_map(c, i):
            # Clamp so duplicated trailing blocks (when n_blocks is not a
            # multiple of NUM_CORES) stay in bounds; the kernel skips them.
            return (jnp.minimum(c * blocks_per_core + i, n_blocks - 1), 0)

        kernel = functools.partial(
            _charbonnier_kernel, eps=eps, block_rows=block_rows,
            blocks_per_core=blocks_per_core, n_blocks=n_blocks,
            n_valid_rows_last=n_valid_rows_last, needs_mask=needs_mask)

        partials = pl.pallas_call(
            kernel,
            out_shape=jax.ShapeDtypeStruct((NUM_CORES, SUBLANES, LANES),
                                           jnp.float32),
            grid_spec=pltpu.PrefetchScalarGridSpec(
                num_scalar_prefetch=0,
                grid=(NUM_CORES, blocks_per_core),
                in_specs=[
                    pl.BlockSpec((block_rows, LANES), in_map),
                    pl.BlockSpec((block_rows, LANES), in_map),
                ],
                out_specs=pl.BlockSpec((1, SUBLANES, LANES),
                                       lambda c, i: (c, 0, 0)),
                scratch_shapes=[pltpu.VMEM((SUBLANES, LANES), jnp.float32)],
            ),
            compiler_params=pltpu.CompilerParams(
                dimension_semantics=("parallel", "arbitrary"),
                vmem_limit_bytes=vmem_limit),
            cost_estimate=pl.CostEstimate(
                flops=3 * n_aligned,
                transcendentals=n_aligned,
                bytes_accessed=2 * n_aligned * itemsize
                + NUM_CORES * SUBLANES * LANES * 4),
        )(x2, y2)

        total = jnp.sum(partials)

    if n_aligned != n:
        # <128-element tail handled in plain JAX -- avoids padding (and hence
        # an extra full HBM read+write of) both inputs.
        xt = xf[n_aligned:].astype(jnp.float32)
        yt = yf[n_aligned:].astype(jnp.float32)
        dt = xt - yt
        total = total + jnp.sum(jnp.sqrt(dt * dt + jnp.float32(eps)))

    return total / jnp.float32(n)


if __name__ == "__main__":
    key = jax.random.PRNGKey(0)
    k1, k2 = jax.random.split(key)
    # NCHW, small shapes: batch=2, channels=4, spatial=16x16
    source = jax.random.normal(k1, (2, 4, 16, 16), dtype=jnp.float32)
    target = jax.random.normal(k2, (2, 4, 16, 16), dtype=jnp.float32)

    loss = charbonnier_loss(source, target)
    loss = jax.block_until_ready(loss)

    # Pure-JAX reference check (same eps convention as the PyTorch module:
    # sqrt(diff^2 + eps), not eps^2).
    eps = 1e-12
    ref = jnp.mean(jnp.sqrt((source - target) ** 2 + eps))
    assert jnp.allclose(loss, ref, rtol=1e-5, atol=1e-6), (loss, ref)

    # Also exercise a non-128-divisible size (aligned-prefix + JAX-tail path,
    # and the partial-last-block row mask inside the kernel).
    k3, k4 = jax.random.split(k1)
    s2 = jax.random.normal(k3, (3, 3, 13, 11), dtype=jnp.float32)
    t2 = jax.random.normal(k4, (3, 3, 13, 11), dtype=jnp.float32)
    loss2 = jax.block_until_ready(charbonnier_loss(s2, t2))
    ref2 = jnp.mean(jnp.sqrt((s2 - t2) ** 2 + eps))
    assert jnp.allclose(loss2, ref2, rtol=1e-5, atol=1e-6), (loss2, ref2)

    print("KERNEL_OK")
</pallas_src>

<mosaic_0001>
module attributes {stable_mosaic.version = 11 : i64} {
  func.func @_charbonnier_kernel(%arg0: i32, %arg1: i32, %arg2: memref<16x128xf32, #tpu.memory_space<vmem>>, %arg3: memref<16x128xf32, #tpu.memory_space<vmem>>, %arg4: memref<1x8x128xf32, #tpu.memory_space<vmem>>, %arg5: memref<8x128xf32, #tpu.memory_space<vmem>>) attributes {dimension_semantics = [#tpu.dimension_semantics<parallel>, #tpu.dimension_semantics<arbitrary>], iteration_bounds = array<i64: 2, 1>, scalar_prefetch = 0 : i64, scratch_operands = 1 : i64, tpu.core_type = #tpu.core_type<tc>, window_params = [{transform_indices = @transform_0, window_bounds = array<i64: 16, 128>}, {transform_indices = @transform_1, window_bounds = array<i64: 16, 128>}, {transform_indices = @transform_2, window_bounds = array<i64: 1, 8, 128>}]} {
    %c1_i32 = arith.constant 1 : i32
    %0 = arith.muli %arg0, %c1_i32 : i32
    %1 = arith.addi %0, %arg1 : i32
    %c0_i32 = arith.constant 0 : i32
    %2 = arith.cmpi eq, %arg1, %c0_i32 : i32
    %3 = arith.extui %2 : i1 to i32
    %c0_i32_0 = arith.constant 0 : i32
    %4 = arith.cmpi ne, %3, %c0_i32_0 : i32
    scf.if %4 {
      %cst_8 = arith.constant 0.000000e+00 : f32
      %18 = vector.broadcast %cst_8 : f32 to vector<8x128xf32>
      %c0_9 = arith.constant 0 : index
      %c0_10 = arith.constant 0 : index
      %19 = vector.load %arg5[%c0_9, %c0_10] : memref<8x128xf32, #tpu.memory_space<vmem>>, vector<8x128xf32>
      tpu.vector_store %arg5[%c0_9, %c0_10], %18 {strides = array<i32>} : memref<8x128xf32, #tpu.memory_space<vmem>>, vector<8x128xf32>,
    } else {
    }
    %c0 = arith.constant 0 : index
    %c0_1 = arith.constant 0 : index
    %5 = vector.load %arg2[%c0, %c0_1] : memref<16x128xf32, #tpu.memory_space<vmem>>, vector<16x128xf32>
    %c0_2 = arith.constant 0 : index
    %c0_3 = arith.constant 0 : index
    %6 = vector.load %arg3[%c0_2, %c0_3] : memref<16x128xf32, #tpu.memory_space<vmem>>, vector<16x128xf32>
    %7 = arith.subf %5, %6 : vector<16x128xf32>
    %8 = arith.mulf %7, %7 : vector<16x128xf32>
    %cst = arith.constant 9.99999996E-13 : f32
    %9 = vector.broadcast %cst : f32 to vector<16x128xf32>
    %10 = arith.addf %8, %9 : vector<16x128xf32>
    %11 = math.sqrt %10 : vector<16x128xf32>
    %c1_i32_4 = arith.constant 1 : i32
    %12 = arith.cmpi slt, %1, %c1_i32_4 : i32
    %13 = arith.extui %12 : i1 to i32
    %c0_i32_5 = arith.constant 0 : i32
    %14 = arith.cmpi ne, %13, %c0_i32_5 : i32
    scf.if %14 {
      %c0_8 = arith.constant 0 : index
      %c0_9 = arith.constant 0 : index
      %18 = vector.load %arg5[%c0_8, %c0_9] : memref<8x128xf32, #tpu.memory_space<vmem>>, vector<8x128xf32>
      %19 = vector.shape_cast %11 : vector<16x128xf32> to vector<2x8x128xf32>
      %cst_10 = arith.constant dense<0.000000e+00> : vector<8x128xf32>
      %20 = vector.multi_reduction <add>, %19, %cst_10 [0] : vector<2x8x128xf32> to vector<8x128xf32>
      %21 = arith.addf %18, %20 : vector<8x128xf32>
      %c0_11 = arith.constant 0 : index
      %c0_12 = arith.constant 0 : index
      %22 = vector.load %arg5[%c0_11, %c0_12] : memref<8x128xf32, #tpu.memory_space<vmem>>, vector<8x128xf32>
      tpu.vector_store %arg5[%c0_11, %c0_12], %21 {strides = array<i32>} : memref<8x128xf32, #tpu.memory_space<vmem>>, vector<8x128xf32>,
    } else {
    }
    %c0_i32_6 = arith.constant 0 : i32
    %15 = arith.cmpi eq, %arg1, %c0_i32_6 : i32
    %16 = arith.extui %15 : i1 to i32
    %c0_i32_7 = arith.constant 0 : i32
    %17 = arith.cmpi ne, %16, %c0_i32_7 : i32
    scf.if %17 {
      %c0_8 = arith.constant 0 : index
      %c0_9 = arith.constant 0 : index
      %18 = vector.load %arg5[%c0_8, %c0_9] : memref<8x128xf32, #tpu.memory_space<vmem>>, vector<8x128xf32>
      %c0_10 = arith.constant 0 : index
      %c0_11 = arith.constant 0 : index
      %c0_12 = arith.constant 0 : index
      %19 = vector.load %arg4[%c0_10, %c0_11, %c0_12] : memref<1x8x128xf32, #tpu.memory_space<vmem>>, vector<1x8x128xf32>
      %20 = vector.shape_cast %19 : vector<1x8x128xf32> to vector<8x128xf32>
      %21 = vector.shape_cast %18 : vector<8x128xf32> to vector<1x8x128xf32>
      tpu.vector_store %arg4[%c0_10, %c0_11, %c0_12], %21 {strides = array<i32>} : memref<1x8x128xf32, #tpu.memory_space<vmem>>, vector<1x8x128xf32>,
    } else {
    }
    return
  }
  func.func @transform_0(%arg0: i32, %arg1: i32) -> (i32, i32) {
    %c1_i32 = arith.constant 1 : i32
    %0 = arith.muli %arg0, %c1_i32 : i32
    %1 = arith.addi %0, %arg1 : i32
    %c0_i32 = arith.constant 0 : i32
    %2 = arith.minsi %1, %c0_i32 : i32
    %c0_i32_0 = arith.constant 0 : i32
    %c0_i32_1 = arith.constant 0 : i32
    return %2, %c0_i32_0 : i32, i32
  }
  func.func @transform_1(%arg0: i32, %arg1: i32) -> (i32, i32) {
    %c1_i32 = arith.constant 1 : i32
    %0 = arith.muli %arg0, %c1_i32 : i32
    %1 = arith.addi %0, %arg1 : i32
    %c0_i32 = arith.constant 0 : i32
    %2 = arith.minsi %1, %c0_i32 : i32
    %c0_i32_0 = arith.constant 0 : i32
    %c0_i32_1 = arith.constant 0 : i32
    return %2, %c0_i32_0 : i32, i32
  }
  func.func @transform_2(%arg0: i32, %arg1: i32) -> (i32, i32, i32) {
    %c0_i32 = arith.constant 0 : i32
    %c0_i32_0 = arith.constant 0 : i32
    %c0_i32_1 = arith.constant 0 : i32
    return %arg0, %c0_i32, %c0_i32_0 : i32, i32, i32
  }
}

</mosaic_0001>

<llo_original>
// kernel: tpu_custom_call.1
$region0: #{tpu_custom_call.1}
  #allocation0 [shape = 'u32[]', space=smem, size = 0x4, offset = 0x4, fixed_abs, tag = 'smem constant byte address 0x4 - core index']
  #allocation1 [shape = 'u32[72,128]{1,0:T(1,128)}', space=vmem, size = 0x9000, scoped, tag = 'internal scratch']
  #allocation2 [shape = 'f32[8,128]{1,0:T(8,128)}', space=vmem, size = 0x1000, scoped, tag = 'scratch operand']
  %s0 = inlined_call_operand.hbm [shape: f32[16,128], index: 0, kind: input, shape index: {}]
  %s1 = inlined_call_operand.hbm [shape: f32[16,128], index: 1, kind: input, shape index: {}]
  %s2 = inlined_call_operand.hbm [shape: f32[2,8,128], index: 2, kind: output, shape index: {}]
  %s3 = sld [smem:[#allocation0]]
  $region61: #{tpu_custom_call.1} parent=0
    _
  %s5 = ssub.s32 1, %s3
  %s6 = scalar_select 0, %s5, %s3
  $region1: #{tpu_custom_call.1} parent=0
    #allocation3 [shape = 'u8[16384]{0}', space=vmem, size = 0x4000, scoped, tag = 'input window, operand 0']
    #allocation4 [shape = 's32[2]{0}', space=sflag, size = 0x8, scoped, tag = 'scoped memory for tpu_custom_call.1']
    #allocation5 [shape = 's32[2]{0}', space=sflag, size = 0x8, scoped, tag = 'scoped memory for tpu_custom_call.1']
    #allocation6 [shape = 'u8[16384]{0}', space=vmem, size = 0x4000, scoped, tag = 'input window, operand 1']
    #allocation7 [shape = 's32[2]{0}', space=sflag, size = 0x8, scoped, tag = 'scoped memory for tpu_custom_call.1']
    #allocation8 [shape = 'u8[8192]{0}', space=vmem, size = 0x2000, scoped, tag = 'output window, operand 0']
    %7 = vsyncpa [#allocation4], 0
    %s8 = scalar_lea.sflag [#allocation4], 1
    %9 = vsyncpa %s8, 0
    %10 = vsyncpa [#allocation7], 0
    %s11 = scalar_lea.sflag [#allocation7], 1
    %12 = vsyncpa %s11, 0
    %13 = vsyncpa [#allocation5], 0
    %s14 = scalar_lea.sflag [#allocation5], 1
    %15 = vsyncpa %s14, 0
    loop: start=0, step=1, limit=4
    $region2: #{tpu_custom_call.1} parent=1 // loop_pre_header
      _
    $region3: #{tpu_custom_call.1} parent=1 // loop_header
      %s17 = sphi 0, %s21
      %p18 = scmp.ge.s32.totalorder %s17, 4
      %s24 = sphi 0, %s36
      %s25 = sphi 0, %s32
      %s26 = sphi 0, %s24
      %s27 = sphi 0, %s25
      %s28 = sphi 0, %s26
      %s29 = sphi 0, %s27
      %s45 = sphi 0, %s47
      %s48 = sphi 0, %s45
      %s49 = sphi 0, %s48
      %s65 = sphi 0, %s49
      %s77 = sphi 0, %s79
      %s80 = sphi 0, %s77
      %s81 = sphi 0, %s80
      %s97 = sphi 0, %s81
      %s103 = sphi 0, %s105
      %s106 = sphi 0, %s103
      %s107 = sphi 0, %s106
      %s123 = sphi 0, %s107
    $region4: #{tpu_custom_call.1} parent=1 // loop_header_branch
      %20 = sbr.rel (%p18) target = $region8
    $region5: #{tpu_custom_call.1} parent=1 // loop_body
      %s22 = ssub.s32 %s17, 1
      %s23 = ssub.s32 %s17, 2
      %s30 = sadd.s32 1, %s25
      %p31 = scmp.ge.s32.totalorder %s30, 1
      %s32 = scalar_select %p31, 0, %s30
      %s33 = sadd.s32 1, %s24
      %s34 = scalar_select %p31, %s33, %s24
      %p35 = scmp.ge.s32.totalorder %s34, 2
      %s36 = scalar_select %p35, 0, %s34
      %s37 = sadd.s32 %s24, %s25
      %p38 = scmp.lt.s32.totalorder %s37, 0
      %s39 = scalar_select %p38, %s37, 0
      %s40 = sadd.s32 %s36, %s32
      %p41 = scmp.lt.s32.totalorder %s40, 0
      %s42 = scalar_select %p41, %s40, 0
      %s43 = ssub.s32 %s39, %s42
      %p44 = scmp.eq.s32.totalorder %s43, 0
      %s46 = sadd.s32 %s45, 1
      %s47 = scalar_select %p44, %s45, %s46
      %p50 = pneg %p44
      %p51 = scmp.eq.s32.totalorder %s17, 1
      %p52 = por %p50, %p51
      %p53 = scmp.ne.s32.totalorder %s45, %s48
      %p54 = scmp.eq.s32.totalorder %s17, 0
      %p55 = por %p53, %p54
      %p56 = scmp.ne.s32.totalorder %s45, %s48
      %p57 = scmp.eq.s32.totalorder %s22, 1
      %p58 = por %p56, %p57
      %p59 = scmp.ne.s32.totalorder %s48, %s49
      %p60 = scmp.eq.s32.totalorder %s22, 0
      %p61 = por %p59, %p60
      %p62 = scmp.ne.s32.totalorder %s48, %s49
      %p63 = scmp.eq.s32.totalorder %s23, 1
      %p64 = por %p62, %p63
      %p66 = scmp.ne.s32.totalorder %s49, %s65
      %p67 = scmp.eq.s32.totalorder %s23, 0
      %p68 = por %p66, %p67
      %s69 = sadd.s32 %s24, %s25
      %p70 = scmp.lt.s32.totalorder %s69, 0
      %s71 = scalar_select %p70, %s69, 0
      %s72 = sadd.s32 %s36, %s32
      %p73 = scmp.lt.s32.totalorder %s72, 0
      %s74 = scalar_select %p73, %s72, 0
      %s75 = ssub.s32 %s71, %s74
      %p76 = scmp.eq.s32.totalorder %s75, 0
      %s78 = sadd.s32 %s77, 1
      %s79 = scalar_select %p76, %s77, %s78
      %p82 = pneg %p76
      %p83 = scmp.eq.s32.totalorder %s17, 1
      %p84 = por %p82, %p83
      %p85 = scmp.ne.s32.totalorder %s77, %s80
      %p86 = scmp.eq.s32.totalorder %s17, 0
      %p87 = por %p85, %p86
      %p88 = scmp.ne.s32.totalorder %s77, %s80
      %p89 = scmp.eq.s32.totalorder %s22, 1
      %p90 = por %p88, %p89
      %p91 = scmp.ne.s32.totalorder %s80, %s81
      %p92 = scmp.eq.s32.totalorder %s22, 0
      %p93 = por %p91, %p92
      %p94 = scmp.ne.s32.totalorder %s80, %s81
      %p95 = scmp.eq.s32.totalorder %s23, 1
      %p96 = por %p94, %p95
      %p98 = scmp.ne.s32.totalorder %s81, %s97
      %p99 = scmp.eq.s32.totalorder %s23, 0
      %p100 = por %p98, %p99
      %s101 = ssub.s32 %s24, %s36
      %p102 = scmp.eq.s32.totalorder %s101, 0
      %s104 = sadd.s32 %s103, 1
      %s105 = scalar_select %p102, %s103, %s104
      %p108 = pneg %p102
      %p109 = scmp.eq.s32.totalorder %s17, 1
      %p110 = por %p108, %p109
      %p111 = scmp.ne.s32.totalorder %s103, %s106
      %p112 = scmp.eq.s32.totalorder %s17, 0
      %p113 = por %p111, %p112
      %p114 = scmp.ne.s32.totalorder %s103, %s106
      %p115 = scmp.eq.s32.totalorder %s22, 1
      %p116 = por %p114, %p115
      %p117 = scmp.ne.s32.totalorder %s106, %s107
      %p118 = scmp.eq.s32.totalorder %s22, 0
      %p119 = por %p117, %p118
      %p120 = scmp.ne.s32.totalorder %s106, %s107
      %p121 = scmp.eq.s32.totalorder %s23, 1
      %p122 = por %p120, %p121
      %p124 = scmp.ne.s32.totalorder %s107, %s123
      %p125 = scmp.eq.s32.totalorder %s23, 0
      %p126 = por %p124, %p125
      %p127 = scmp.le.s32.totalorder 1, %s17
      %p128 = scmp.lt.s32.totalorder %s17, 3
      %p129 = pnand %p127, %p128
      %p130 = pneg %p129
      // Predicated region
      $region9: #{tpu_custom_call.1} parent=5 // pred_check
        _
      $region10: #{tpu_custom_call.1} parent=5 // pred_check_branch
        %132 = sbr.rel (%p129) target = $region12
      $region11: #{tpu_custom_call.1} parent=5 // pred_region
        %s133 = ssub.s32 %s17, 1
      $region12: #{tpu_custom_call.1} parent=5 // pred_fallthru
        _
      %p134 = scmp.lt.s32.totalorder %s17, 2
      // Predicated region
      $region13: #{tpu_custom_call.1} parent=5 // pred_check
        %p135 = pneg %p134
      $region14: #{tpu_custom_call.1} parent=5 // pred_check_branch
        %137 = sbr.rel (%p135) target = $region16
      $region15: #{tpu_custom_call.1} parent=5 // pred_region
        // Predicated region
        $region17: #{tpu_custom_call.1} parent=15 // pred_check
          %p138 = pneg %p55
        $region18: #{tpu_custom_call.1} parent=15 // pred_check_branch
          %140 = sbr.rel (%p138) target = $region20
        $region19: #{tpu_custom_call.1} parent=15 // pred_region
          %s141 = sand.u32 %s45, 1
          %s142 = scalar_lea.sflag [#allocation4], %s141
          %s143 = sand.u32 %s45, 1
          %s144 = smul.addr %s143, 16
          %s145 = scalar_lea.vmem [#allocation3], %s144
          %s146 = sadd.s32 %s24, %s25
          %p147 = scmp.lt.s32.totalorder %s146, 0
          %s148 = scalar_select %p147, %s146, 0
          %s149 = smul.u32 2, %s148
          %151 = vsyncadd %s142, 0
          %s152 = smul.addr %s149, 8
          %s153 = scalar_lea.hbm %s0, %s152
          %s154 = sshll.u32 %s153, 4
          %s155 = int_to_ptr.hbm [resolvable:$true] %s154
          %s156 = sshll.u32 %s145, 4
          %s157 = int_to_ptr.vmem [resolvable:$true] %s156
          %162 = dma.hbm_to_vmem [thread:$0]  %s155, 256, %s157, %s142, 128, 128, 8
        $region20: #{tpu_custom_call.1} parent=15 // pred_fallthru
          _
        // Predicated region
        $region21: #{tpu_custom_call.1} parent=15 // pred_check
          %p163 = pneg %p87
        $region22: #{tpu_custom_call.1} parent=15 // pred_check_branch
          %165 = sbr.rel (%p163) target = $region24
        $region23: #{tpu_custom_call.1} parent=15 // pred_region
          %s166 = sand.u32 %s77, 1
          %s167 = scalar_lea.sflag [#allocation7], %s166
          %s168 = sand.u32 %s77, 1
          %s169 = smul.addr %s168, 16
          %s170 = scalar_lea.vmem [#allocation6], %s169
          %s171 = sadd.s32 %s24, %s25
          %p172 = scmp.lt.s32.totalorder %s171, 0
          %s173 = scalar_select %p172, %s171, 0
          %s174 = smul.u32 2, %s173
          %176 = vsyncadd %s167, 0
          %s177 = smul.addr %s174, 8
          %s178 = scalar_lea.hbm %s1, %s177
          %s179 = sshll.u32 %s178, 4
          %s180 = int_to_ptr.hbm [resolvable:$true] %s179
          %s181 = sshll.u32 %s170, 4
          %s182 = int_to_ptr.vmem [resolvable:$true] %s181
          %187 = dma.hbm_to_vmem [thread:$0]  %s180, 256, %s182, %s167, 128, 128, 8
        $region24: #{tpu_custom_call.1} parent=15 // pred_fallthru
          _
      $region16: #{tpu_custom_call.1} parent=5 // pred_fallthru
        _
      %p188 = scmp.le.s32.totalorder 1, %s17
      %p189 = scmp.lt.s32.totalorder %s17, 3
      %p190 = pnand %p188, %p189
      %p191 = pneg %p190
      // Predicated region
      $region25: #{tpu_custom_call.1} parent=5 // pred_check
        _
      $region26: #{tpu_custom_call.1} parent=5 // pred_check_branch
        %193 = sbr.rel (%p190) target = $region28
      $region27: #{tpu_custom_call.1} parent=5 // pred_region
        %s194 = ssub.s32 %s17, 1
        %s195 = sand.u32 %s48, 1
        %s196 = scalar_lea.sflag [#allocation4], %s195
        %s197 = sand.u32 %s48, 1
        %s198 = smul.addr %s197, 16
        %s199 = scalar_lea.vmem [#allocation3], %s198
        // Predicated region
        $region29: #{tpu_custom_call.1} parent=27 // pred_check
          %p200 = pneg %p61
        $region30: #{tpu_custom_call.1} parent=27 // pred_check_branch
          %202 = sbr.rel (%p200) target = $region32
        $region31: #{tpu_custom_call.1} parent=27 // pred_region
          %204 = dma.done %s196, 256
        $region32: #{tpu_custom_call.1} parent=27 // pred_fallthru
          _
        %s205 = sand.u32 %s80, 1
        %s206 = scalar_lea.sflag [#allocation7], %s205
        %s207 = sand.u32 %s80, 1
        %s208 = smul.addr %s207, 16
        %s209 = scalar_lea.vmem [#allocation6], %s208
        // Predicated region
        $region33: #{tpu_custom_call.1} parent=27 // pred_check
          %p210 = pneg %p93
        $region34: #{tpu_custom_call.1} parent=27 // pred_check_branch
          %212 = sbr.rel (%p210) target = $region36
        $region35: #{tpu_custom_call.1} parent=27 // pred_region
          %214 = dma.done %s206, 256
        $region36: #{tpu_custom_call.1} parent=27 // pred_fallthru
          _
        %s215 = sand.u32 %s48, 1
        %s216 = scalar_lea.sflag [#allocation4], %s215
        %s217 = sand.u32 %s48, 1
        %s218 = smul.addr %s217, 16
        %s219 = scalar_lea.vmem [#allocation3], %s218
        %p220 = pneg %p61
        %p221 = pneg %p58
        %s222 = sand.u32 %s80, 1
        %s223 = scalar_lea.sflag [#allocation7], %s222
        %s224 = sand.u32 %s80, 1
        %s225 = smul.addr %s224, 16
        %s226 = scalar_lea.vmem [#allocation6], %s225
        %p227 = pneg %p93
        %p228 = pneg %p90
        %p229 = pneg %p119
        %p230 = pneg %p116
        %s231 = sand.u32 %s106, 1
        %s232 = scalar_lea.sflag [#allocation5], %s231
        %s233 = sand.u32 %s106, 1
        %s234 = smul.addr %s233, 8
        %s235 = scalar_lea.vmem [#allocation8], %s234
        %s236 = sadd.s32 %s26, %s27
        %p237 = scmp.lt.s32.totalorder %s236, 0
        %s238 = scalar_select %p237, %s236, 0
        %s239 = smul.u32 2, %s238
        %s240 = sadd.s32 %s26, %s27
        %p241 = scmp.lt.s32.totalorder %s240, 0
        %s242 = scalar_select %p241, %s240, 0
        %s243 = smul.u32 2, %s242
        %s244 = sadd.s32 %s26, %s27
        %p245 = scmp.eq.s32.totalorder %s27, 0
        // Predicated region
        $region37: #{tpu_custom_call.1} parent=27 // pred_check
          %p246 = pneg %p245
        $region38: #{tpu_custom_call.1} parent=27 // pred_check_branch
          %248 = sbr.rel (%p246) target = $region40
        $region39: #{tpu_custom_call.1} parent=27 // pred_region
          %249 = vst [vmem:[#allocation2] sm:$0xff] 0.0
        $region40: #{tpu_custom_call.1} parent=27 // pred_fallthru
          _
        %v250 = vld [vmem:[%s199] sm:$0xff]
        %v251 = vld [vmem:[%s199 + $0x8] sm:$0xff]
        %v252 = vld [vmem:[%s209] sm:$0xff]
        %v253 = vld [vmem:[%s209 + $0x8] sm:$0xff]
        %v254 = vsub.f32 %v250, %v252
        %v255 = vsub.f32 %v251, %v253
        %v256 = vmul.f32 %v254, %v254
        %v257 = vmul.f32 %v255, %v255
        %v258 = vadd.f32 %v256, 1e-12
        %v259 = vadd.f32 %v257, 1e-12
        %v260 = vrsqrt.pop %v258
        %v261 = vmul.f32 %v260, %v258
        %v262 = vmul.f32 %v261, %v260
        %v263 = vmul.f32 0.5, %v262
        %v264 = vsub.f32 1.5, %v263
        %v265 = vmul.f32 %v260, %v264
        %v266 = vmul.f32 %v258, %v265
        %vm267 = vcmp.eq.f32.partialorder %v258, inf
        %v268 = vsel %vm267, %v258, %v266
        %vm269 = vcmp.eq.f32.partialorder %v258, 0.0
        %v270 = vand.u32 %v258, 2147483648
        %v271 = vsel %vm269, %v270, %v268
        %v272 = vrsqrt.pop %v259
        %v273 = vmul.f32 %v272, %v259
        %v274 = vmul.f32 %v273, %v272
        %v275 = vmul.f32 0.5, %v274
        %v276 = vsub.f32 1.5, %v275
        %v277 = vmul.f32 %v272, %v276
        %v278 = vmul.f32 %v259, %v277
        %vm279 = vcmp.eq.f32.partialorder %v259, inf
        %v280 = vsel %vm279, %v259, %v278
        %vm281 = vcmp.eq.f32.partialorder %v259, 0.0
        %v282 = vand.u32 %v259, 2147483648
        %v283 = vsel %vm281, %v282, %v280
        %p284 = scmp.lt.s32.totalorder %s244, 1
        // Predicated region
        $region41: #{tpu_custom_call.1} parent=27 // pred_check
          %p285 = pneg %p284
        $region42: #{tpu_custom_call.1} parent=27 // pred_check_branch
          %287 = sbr.rel (%p285) target = $region44
        $region43: #{tpu_custom_call.1} parent=27 // pred_region
          %v288 = vld [vmem:[#allocation2] sm:$0xff]
          %v289 = vadd.f32 %v271, %v283
          %v290 = vadd.f32 %v288, %v289
          %291 = vst [vmem:[#allocation2] sm:$0xff] %v290
        $region44: #{tpu_custom_call.1} parent=27 // pred_fallthru
          _
        // Predicated region
        $region45: #{tpu_custom_call.1} parent=27 // pred_check
          %p292 = pneg %p245
        $region46: #{tpu_custom_call.1} parent=27 // pred_check_branch
          %294 = sbr.rel (%p292) target = $region48
        $region47: #{tpu_custom_call.1} parent=27 // pred_region
          %v295 = vld [vmem:[#allocation2] sm:$0xff]
          %296 = vst [vmem:[%s235] sm:$0xff] %v295
        $region48: #{tpu_custom_call.1} parent=27 // pred_fallthru
          _
        %s297 = sand.u32 %s106, 1
        %s298 = scalar_lea.sflag [#allocation5], %s297
        %s299 = sand.u32 %s106, 1
        %s300 = smul.addr %s299, 8
        %s301 = scalar_lea.vmem [#allocation8], %s300
        // Predicated region
        $region49: #{tpu_custom_call.1} parent=27 // pred_check
          %p302 = pneg %p116
        $region50: #{tpu_custom_call.1} parent=27 // pred_check_branch
          %304 = sbr.rel (%p302) target = $region52
        $region51: #{tpu_custom_call.1} parent=27 // pred_region
          %306 = vsyncadd %s298, 0
          %s307 = smul.addr %s26, 8
          %s308 = scalar_lea.hbm %s2, %s307
          %s310 = sshll.u32 %s301, 4
          %s311 = int_to_ptr.vmem [resolvable:$true] %s310
          %s312 = sshll.u32 %s308, 4
          %s313 = int_to_ptr.hbm [resolvable:$true] %s312
          %315 = dma.vmem_to_hbm [thread:$0]  %s311, 128, %s313, %s298
        $region52: #{tpu_custom_call.1} parent=27 // pred_fallthru
          _
      $region28: #{tpu_custom_call.1} parent=5 // pred_fallthru
        _
      %p316 = scmp.le.s32.totalorder 2, %s17
      // Predicated region
      $region53: #{tpu_custom_call.1} parent=5 // pred_check
        %p317 = pneg %p316
      $region54: #{tpu_custom_call.1} parent=5 // pred_check_branch
        %319 = sbr.rel (%p317) target = $region56
      $region55: #{tpu_custom_call.1} parent=5 // pred_region
        %s320 = ssub.s32 %s17, 2
        // Predicated region
        $region57: #{tpu_custom_call.1} parent=55 // pred_check
          %p321 = pneg %p122
        $region58: #{tpu_custom_call.1} parent=55 // pred_check_branch
          %323 = sbr.rel (%p321) target = $region60
        $region59: #{tpu_custom_call.1} parent=55 // pred_region
          %s324 = sand.u32 %s107, 1
          %s325 = scalar_lea.sflag [#allocation5], %s324
          %s326 = sand.u32 %s107, 1
          %s327 = smul.addr %s326, 8
          %s328 = scalar_lea.vmem [#allocation8], %s327
          %330 = dma.done %s325, 128
        $region60: #{tpu_custom_call.1} parent=55 // pred_fallthru
          _
      $region56: #{tpu_custom_call.1} parent=5 // pred_fallthru
        _
    $region6: #{tpu_custom_call.1} parent=1 // loop_footer
      %s21 = sadd.s32 1, %s17
    $region7: #{tpu_custom_call.1} parent=1 // loop_footer_branch
      %16 = sbr.rel target = $region3
    $region8: #{tpu_custom_call.1} parent=1 // loop_exit
      _
    %331 = vsyncpa [#allocation4], 1
    %s332 = scalar_lea.sflag [#allocation4], 1
    %333 = vsyncpa %s332, 1
    %334 = vsyncpa [#allocation7], 1
    %s335 = scalar_lea.sflag [#allocation7], 1
    %336 = vsyncpa %s335, 1
    %337 = vsyncpa [#allocation5], 1
    %s338 = scalar_lea.sflag [#allocation5], 1
    %339 = vsyncpa %s338, 1

</llo_original>
